<compile_context>
chip_gen: v7x
topology: tpu7x:2x2x1
jax: 0.10.0
libtpu: 0.0.40
codegen_flags: <defaults>
</compile_context>

<pallas_src>
import jax
import jax.numpy as jnp
from jax.experimental import pallas as pl
from jax.experimental.pallas import tpu as pltpu

LANE = 128          # TPU lane width
MAX_TILE_N = 8192   # lane-dense batch tile (f32): 2 bufs * (in_f+out_f) * 8192 * 4B ≈ 0.2 MiB VMEM


def linear_kernel(w_ref, b_ref, xT_ref, oT_ref):
    """VPU-only linear: y^T[0, :] = sum_k w[0, k] * x^T[k, :] + b[0].

    w_ref : SMEM (1, in_f)   -- scalar reads, broadcast for free into VPU ops
    b_ref : SMEM (1,)
    xT_ref: VMEM (in_f, TN)  -- batch on the lane axis (lane-dense)
    oT_ref: VMEM (1, TN)     -- lane-dense, unmasked stores
    """
    in_f = xT_ref.shape[0]
    acc = jnp.full(oT_ref.shape, b_ref[0], dtype=jnp.float32)
    for k in range(in_f):                              # static unroll (in_f == 2)
        acc = acc + w_ref[0, k] * xT_ref[k:k + 1, :]
    oT_ref[...] = acc.astype(oT_ref.dtype)


def linear_pallas(x, weight, bias):
    """y = x @ W^T + b (torch.nn.Linear semantics). x: (N, in_f), W: (out_f, in_f), b: (out_f,)."""
    n, in_f = x.shape
    out_f = weight.shape[0]
    assert out_f == 1 and weight.shape == (out_f, in_f) and bias.shape == (out_f,)

    # Batch goes on the lane axis: work on x^T, padded to a lane-dense tile width.
    n_lane = -(-n // LANE) * LANE                      # round batch up to a lane multiple
    tn = min(n_lane, MAX_TILE_N)                       # lane-dense tile (multiple of 128)
    n_pad = -(-n // tn) * tn                           # pad batch to a multiple of the tile

    xT = jnp.pad(x.astype(jnp.float32).T, ((0, 0), (0, n_pad - n)))   # (in_f, n_pad)
    w = weight.astype(jnp.float32)
    b = bias.astype(jnp.float32)

    yT = pl.pallas_call(
        linear_kernel,
        out_shape=jax.ShapeDtypeStruct((out_f, n_pad), jnp.float32),
        grid=(n_pad // tn,),
        in_specs=[
            pl.BlockSpec(memory_space=pltpu.MemorySpace.SMEM),   # weight -> SMEM scalars
            pl.BlockSpec(memory_space=pltpu.MemorySpace.SMEM),   # bias   -> SMEM scalar
            pl.BlockSpec((in_f, tn), lambda i: (0, i)),          # x^T batch tile (lane-dense)
        ],
        out_specs=pl.BlockSpec((out_f, tn), lambda i: (0, i)),   # y^T batch tile (lane-dense)
        compiler_params=pltpu.CompilerParams(
            dimension_semantics=("parallel",),        # batch tiles may shard across v7x's 2 TCs
            vmem_limit_bytes=32 * 1024 * 1024,        # explicit, safe on v5e/v6e/v7x; usage ~0.2 MiB
        ),
    )(w, b, xT)

    return yT[:, :n].T.astype(x.dtype)                # back to (N, out_f)


if __name__ == "__main__":
    key = jax.random.PRNGKey(0)
    kx, kw, kb = jax.random.split(key, 3)

    batch = 8
    in_features = 2
    out_features = 1

    # Deterministic parameter init, mimicking nn.Linear's U(-1/sqrt(in), 1/sqrt(in)).
    bound = 1.0 / jnp.sqrt(jnp.float32(in_features))
    weight = jax.random.uniform(
        kw, (out_features, in_features), jnp.float32, -bound, bound
    )
    bias = jax.random.uniform(kb, (out_features,), jnp.float32, -bound, bound)

    x = jax.random.normal(kx, (batch, in_features), jnp.float32)

    y = linear_pallas(x, weight, bias)
    jax.block_until_ready(y)

    # Reference check against plain-JAX linear (matches torch.nn.Linear forward).
    y_ref = x @ weight.T + bias
    assert y.shape == (batch, out_features)
    assert jnp.allclose(y, y_ref, atol=1e-5), "mismatch vs reference"

    print("KERNEL_OK")
</pallas_src>

<mosaic_0001>
module attributes {stable_mosaic.version = 11 : i64} {
  func.func @linear_kernel(%arg0: i32, %arg1: memref<1x2xf32, #tpu.memory_space<smem>>, %arg2: memref<1xf32, #tpu.memory_space<smem>>, %arg3: memref<2x128xf32, #tpu.memory_space<vmem>>, %arg4: memref<1x128xf32, #tpu.memory_space<vmem>>) attributes {dimension_semantics = [#tpu.dimension_semantics<parallel>], iteration_bounds = array<i64: 1>, scalar_prefetch = 0 : i64, scratch_operands = 0 : i64, tpu.core_type = #tpu.core_type<tc>, window_params = [{transform_indices = @transform_0, window_bounds = array<i64: 1, 2>}, {transform_indices = @transform_1, window_bounds = array<i64: 1>}, {transform_indices = @transform_2, window_bounds = array<i64: 2, 128>}, {transform_indices = @transform_3, window_bounds = array<i64: 1, 128>}]} {
    %c0 = arith.constant 0 : index
    %0 = memref.load %arg2[%c0] : memref<1xf32, #tpu.memory_space<smem>>
    %1 = vector.broadcast %0 : f32 to vector<1x128xf32>
    %c0_0 = arith.constant 0 : index
    %c0_1 = arith.constant 0 : index
    %2 = memref.load %arg1[%c0_0, %c0_1] : memref<1x2xf32, #tpu.memory_space<smem>>
    %c0_2 = arith.constant 0 : index
    %c0_3 = arith.constant 0 : index
    %3 = vector.load %arg3[%c0_2, %c0_3] : memref<2x128xf32, #tpu.memory_space<vmem>>, vector<1x128xf32>
    %4 = vector.broadcast %2 : f32 to vector<1x128xf32>
    %5 = arith.mulf %4, %3 : vector<1x128xf32>
    %6 = arith.addf %1, %5 : vector<1x128xf32>
    %c0_4 = arith.constant 0 : index
    %c1 = arith.constant 1 : index
    %7 = memref.load %arg1[%c0_4, %c1] : memref<1x2xf32, #tpu.memory_space<smem>>
    %c1_5 = arith.constant 1 : index
    %c0_6 = arith.constant 0 : index
    %8 = vector.load %arg3[%c1_5, %c0_6] : memref<2x128xf32, #tpu.memory_space<vmem>>, vector<1x128xf32>
    %9 = vector.broadcast %7 : f32 to vector<1x128xf32>
    %10 = arith.mulf %9, %8 : vector<1x128xf32>
    %11 = arith.addf %6, %10 : vector<1x128xf32>
    %c0_7 = arith.constant 0 : index
    %c0_8 = arith.constant 0 : index
    %12 = vector.load %arg4[%c0_7, %c0_8] : memref<1x128xf32, #tpu.memory_space<vmem>>, vector<1x128xf32>
    tpu.vector_store %arg4[%c0_7, %c0_8], %11 {strides = array<i32>} : memref<1x128xf32, #tpu.memory_space<vmem>>, vector<1x128xf32>,
    return
  }
  func.func @transform_0(%arg0: i32) -> (i32, i32) {
    %c0_i32 = arith.constant 0 : i32
    %c0_i32_0 = arith.constant 0 : i32
    %c0_i32_1 = arith.constant 0 : i32
    return %c0_i32, %c0_i32_0 : i32, i32
  }
  func.func @transform_1(%arg0: i32) -> i32 {
    %c0_i32 = arith.constant 0 : i32
    %c0_i32_0 = arith.constant 0 : i32
    return %c0_i32 : i32
  }
  func.func @transform_2(%arg0: i32) -> (i32, i32) {
    %c0_i32 = arith.constant 0 : i32
    %c0_i32_0 = arith.constant 0 : i32
    return %c0_i32, %arg0 : i32, i32
  }
  func.func @transform_3(%arg0: i32) -> (i32, i32) {
    %c0_i32 = arith.constant 0 : i32
    %c0_i32_0 = arith.constant 0 : i32
    return %c0_i32, %arg0 : i32, i32
  }
}

</mosaic_0001>

<llo_original>
// kernel: tpu_custom_call.1
$region0: #{tpu_custom_call.1}
  #allocation0 [shape = 'u32[]', space=smem, size = 0x4, offset = 0x4, fixed_abs, tag = 'smem constant byte address 0x4 - core index']
  #allocation1 [shape = 'u32[144,128]{1,0:T(1,128)}', space=vmem, size = 0x12000, scoped, tag = 'internal scratch']
  #allocation2 [shape = 'f32[1]{0:T(128)S(6)}', space=smem, size = 0x200, scoped, tag = 'scoped memory for tpu_custom_call.1']
  %s0 = inlined_call_operand.vmem [shape: f32[1,2], index: 0, kind: input, shape index: {}]
  %s1 = inlined_call_operand.<no memory space> [shape: f32[1], index: 1, kind: input, shape index: {}]
  %s2 = inlined_call_operand.vmem [shape: f32[2,128], index: 2, kind: input, shape index: {}]
  %s3 = inlined_call_operand.hbm [shape: f32[1,128], index: 3, kind: output, shape index: {}]
  %s4 = sld [smem:[#allocation0]]
  $region26: #{tpu_custom_call.1} parent=0
    _
  %s6 = ssub.s32 1, %s4
  %s7 = scalar_select 0, %s6, %s4
  %8 = sst [smem:[#allocation2]] %s1
  $region1: #{tpu_custom_call.1} parent=0
    #allocation3 [shape = 'u8[512]{0}', space=smem, size = 0x200, scoped, tag = 'input window, operand 0, single buffered']
    #allocation4 [shape = 's32[1]{0}', space=sflag, size = 0x4, scoped, tag = 'scoped memory for tpu_custom_call.1']
    #allocation5 [shape = 's32[1]{0}', space=sflag, size = 0x4, scoped, tag = 'scoped memory for tpu_custom_call.1']
    #allocation6 [shape = 'u8[512]{0}', space=vmem, size = 0x400, scoped, tag = 'output window, operand 0, single buffered']
    %9 = vsyncpa [#allocation5], 0
    %10 = vsyncpa [#allocation4], 0
    // Predicated region
    $region2: #{tpu_custom_call.1} parent=1 // pred_check
      _
    $region3: #{tpu_custom_call.1} parent=1 // pred_check_branch
      %12 = sbr.rel (0) target = $region5
    $region4: #{tpu_custom_call.1} parent=1 // pred_region
      %s14 = ssub.s32 16, 16
      %15 = vsyncadd [#allocation5], %s14
      %s17 = sshll.u32 %s0, 4
      %s18 = int_to_ptr.vmem [resolvable:$true] %s17
      %20 = dma.vmem_to_smem %s18, 16, [#allocation3], [#allocation5]
    $region5: #{tpu_custom_call.1} parent=1 // pred_fallthru
      _
    // Predicated region
    $region6: #{tpu_custom_call.1} parent=1 // pred_check
      _
    $region7: #{tpu_custom_call.1} parent=1 // pred_check_branch
      %22 = sbr.rel (0) target = $region9
    $region8: #{tpu_custom_call.1} parent=1 // pred_region
      _
    $region9: #{tpu_custom_call.1} parent=1 // pred_fallthru
      _
    // Predicated region
    $region10: #{tpu_custom_call.1} parent=1 // pred_check
      _
    $region11: #{tpu_custom_call.1} parent=1 // pred_check_branch
      %24 = sbr.rel (0) target = $region13
    $region12: #{tpu_custom_call.1} parent=1 // pred_region
      _
    $region13: #{tpu_custom_call.1} parent=1 // pred_fallthru
      _
    // Predicated region
    $region14: #{tpu_custom_call.1} parent=1 // pred_check
      _
    $region15: #{tpu_custom_call.1} parent=1 // pred_check_branch
      %26 = sbr.rel (0) target = $region17
    $region16: #{tpu_custom_call.1} parent=1 // pred_region
      %27 = dma.done [#allocation5], 16
    $region17: #{tpu_custom_call.1} parent=1 // pred_fallthru
      _
    %28 = sfence
    %s29 = sld [smem:[#allocation2]]
    %v30 = vstv %s29
    %s31 = sld [smem:[#allocation3]]
    %v32 = vld [vmem:[%s2] sm:$0x1]
    %v33 = vstv %s31
    %v34 = vmul.f32 %v33, %v32
    %v35 = vadd.f32 %v30, %v34
    %s36 = sld [smem:[#allocation3 + $0x1]]
    %v37 = vld [vmem:[%s2 + $0x1] sm:$0x1]
    %v38 = vstv %s36
    %v39 = vmul.f32 %v38, %v37
    %v40 = vadd.f32 %v35, %v39
    %41 = vst [vmem:[#allocation6] sm:$0x1] %v40
    // Predicated region
    $region18: #{tpu_custom_call.1} parent=1 // pred_check
      _
    $region19: #{tpu_custom_call.1} parent=1 // pred_check_branch
      %43 = sbr.rel (0) target = $region21
    $region20: #{tpu_custom_call.1} parent=1 // pred_region
      %s45 = ssub.s32 16, 16
      %46 = vsyncadd [#allocation4], %s45
      %s48 = sshll.u32 [#allocation6], 4
      %s49 = int_to_ptr.vmem [resolvable:$true] %s48
      %51 = dma.vmem_to_hbm [thread:$0]  %s49, 16, %s3, [#allocation4]
    $region21: #{tpu_custom_call.1} parent=1 // pred_fallthru
      _
    // Predicated region
    $region22: #{tpu_custom_call.1} parent=1 // pred_check
      _
    $region23: #{tpu_custom_call.1} parent=1 // pred_check_branch
      %53 = sbr.rel (0) target = $region25
    $region24: #{tpu_custom_call.1} parent=1 // pred_region
      %54 = dma.done [#allocation4], 16
    $region25: #{tpu_custom_call.1} parent=1 // pred_fallthru
      _
    %55 = vsyncpa [#allocation4], 1
    %56 = vsyncpa [#allocation5], 1

</llo_original>
